<compile_context>
chip_gen: v7x
topology: tpu7x:2x2x1
jax: 0.10.0
libtpu: 0.0.40
codegen_flags: <defaults>
</compile_context>

<pallas_src>
from functools import partial

import jax
import jax.numpy as jnp
from jax import lax
from jax.experimental import pallas as pl
from jax.experimental.pallas import tpu as pltpu


def _round_up(n, m):
    return ((n + m - 1) // m) * m


def _phishing_mlp_kernel(x_ref, w1_ref, b1_ref, w2_ref, b2_ref, w3_ref, b3_ref,
                         o_ref):
    """Fused 3-layer MLP on a native batch-major tile, feature-major compute.

    x_ref: [TB, F]  (row-major, exactly as stored in HBM)
    w1: [64, F] b1: [64, 1]   w2: [32, 64] b2: [32, 1]   w3: [1, 32] b3: [1, 1]
    o_ref: [1, TB]  (batch on the lane axis -> lane-dense stores)
    """
    x = x_ref[...]                                   # [TB, F]
    w1 = w1_ref[...].astype(x.dtype)                 # no-op cast for f32 x

    # fc1 + relu:  h1^T = relu(W1 @ x^T + b1)
    # Contract dim 1 of both operands -> no HBM-side transpose of x needed.
    h1 = lax.dot_general(w1, x, (((1,), (1,)), ((), ())),
                         preferred_element_type=jnp.float32)           # [64, TB]
    h1 = jnp.maximum(h1 + b1_ref[...], 0.0)

    # dropout(p=0.2): identity at inference time.
    # TODO(synk): training-mode dropout (PRNG mask + 1/(1-p) scaling) not implemented.

    # fc2 + relu:  h2^T = relu(W2 @ h1^T + b2)
    h2 = jnp.dot(w2_ref[...], h1, preferred_element_type=jnp.float32)  # [32, TB]
    h2 = jnp.maximum(h2 + b2_ref[...], 0.0)

    # fc3 + sigmoid:  y^T = sigmoid(W3 @ h2^T + b3)  -> lane-dense [1, TB]
    # (Moving fc3 to VPU-mul + sublane reduce only pays if the MXU-push slot
    #  binds at this tile size; keep the MXU form until profiling says so.)
    logits = jnp.dot(w3_ref[...], h2, preferred_element_type=jnp.float32)
    o_ref[...] = jax.nn.sigmoid(logits + b3_ref[...])                  # [1, TB]


@partial(jax.jit, static_argnames=("block_b", "core_parallel"))
def phishing_nn_forward(x, params, *, block_b=8192, core_parallel=False):
    """x: [B, input_size] (f32 or bf16).  params in PyTorch [out, in] layout,
    biases as [out, 1] columns.  Returns [B, 1] f32 probabilities."""
    w1, b1 = params["w1"], params["b1"]
    w2, b2 = params["w2"], params["b2"]
    w3, b3 = params["w3"], params["b3"]

    B, F = x.shape
    block_b = max(128, _round_up(block_b, 128))

    if B <= block_b:
        # Single block equal to the full array dims (legal for any B).
        tb = B
        n_tiles = 1
    else:
        # Balanced tiles (multiple of 128) so the partial last tile is nearly
        # full; no jnp.pad — out-of-bounds output columns are simply dropped.
        n_tiles = pl.cdiv(B, block_b)
        tb = _round_up(pl.cdiv(B, n_tiles), 128)
        n_tiles = pl.cdiv(B, tb)

    # Constant index_maps keep the tiny weights/biases VMEM-resident across all
    # batch tiles; only x tiles and output tiles stream.
    resident = lambda a: pl.BlockSpec(a.shape, lambda i: (0,) * a.ndim)

    grid_spec = pl.GridSpec(
        grid=(n_tiles,),
        in_specs=[
            pl.BlockSpec((tb, F), lambda i: (i, 0)),     # streaming native x tiles
            resident(w1), resident(b1),
            resident(w2), resident(b2),
            resident(w3), resident(b3),
        ],
        out_specs=pl.BlockSpec((1, tb), lambda i: (0, i)),   # lane-dense output
    )

    param_bytes = sum(int(a.size) * a.dtype.itemsize
                      for a in (w1, b1, w2, b2, w3, b3))
    cost = pl.CostEstimate(
        flops=2 * B * (F * 64 + 64 * 32 + 32 * 1),
        transcendentals=B,                                  # one sigmoid per row
        bytes_accessed=int(x.size) * x.dtype.itemsize + B * 4 + param_bytes,
    )

    # core_parallel=True shards the batch axis across v7x's 2 TensorCores.
    dims = (pltpu.CORE_PARALLEL,) if core_parallel else ("parallel",)

    out_t = pl.pallas_call(
        _phishing_mlp_kernel,
        out_shape=jax.ShapeDtypeStruct((1, B), jnp.float32),
        grid_spec=grid_spec,
        compiler_params=pltpu.CompilerParams(
            dimension_semantics=dims,
            vmem_limit_bytes=32 * 1024 * 1024,
        ),
        cost_estimate=cost,
    )(x, w1, b1, w2, b2, w3, b3)

    # [1, B] -> [B, 1]  (tiny copy: 4 bytes/row)
    return out_t[0, :][:, None]


def init_params(key, input_size):
    """nn.Linear-style init (U(-1/sqrt(fan_in), +1/sqrt(fan_in))) in PyTorch
    [out, in] layout, biases stored as [out, 1] columns (feature-major)."""
    def linear(key, fan_in, fan_out):
        kw, kb = jax.random.split(key)
        bound = 1.0 / jnp.sqrt(jnp.float32(fan_in))
        w = jax.random.uniform(kw, (fan_out, fan_in), jnp.float32, -bound, bound)
        b = jax.random.uniform(kb, (fan_out, 1), jnp.float32, -bound, bound)
        return w, b

    k1, k2, k3 = jax.random.split(key, 3)
    w1, b1 = linear(k1, input_size, 64)
    w2, b2 = linear(k2, 64, 32)
    w3, b3 = linear(k3, 32, 1)
    return {"w1": w1, "b1": b1, "w2": w2, "b2": b2, "w3": w3, "b3": b3}


def _reference_forward(x, p):
    h1 = jnp.maximum(x @ p["w1"].T + p["b1"].T, 0.0)
    h2 = jnp.maximum(h1 @ p["w2"].T + p["b2"].T, 0.0)
    return jax.nn.sigmoid(h2 @ p["w3"].T + p["b3"].T)


if __name__ == "__main__":
    key = jax.random.PRNGKey(0)
    k_params, k_x = jax.random.split(key)

    batch = 8
    input_size = 16  # tabular phishing-feature vector size (small synthetic choice)

    params = init_params(k_params, input_size)
    x = jax.random.normal(k_x, (batch, input_size), jnp.float32)

    out = phishing_nn_forward(x, params)
    out = jax.block_until_ready(out)

    ref = _reference_forward(x, params)
    assert out.shape == (batch, 1), out.shape
    assert jnp.allclose(out, ref, atol=1e-5, rtol=1e-5), "mismatch vs reference"

    print("KERNEL_OK")
</pallas_src>

<mosaic_0001>
module attributes {stable_mosaic.version = 11 : i64} {
  func.func @_phishing_mlp_kernel(%arg0: i32, %arg1: memref<8x16xf32, #tpu.memory_space<vmem>>, %arg2: memref<64x16xf32, #tpu.memory_space<vmem>>, %arg3: memref<64x1xf32, #tpu.memory_space<vmem>>, %arg4: memref<32x64xf32, #tpu.memory_space<vmem>>, %arg5: memref<32x1xf32, #tpu.memory_space<vmem>>, %arg6: memref<1x32xf32, #tpu.memory_space<vmem>>, %arg7: memref<1x1xf32, #tpu.memory_space<vmem>>, %arg8: memref<1x8xf32, #tpu.memory_space<vmem>>) attributes {dimension_semantics = [#tpu.dimension_semantics<parallel>], iteration_bounds = array<i64: 1>, scalar_prefetch = 0 : i64, scratch_operands = 0 : i64, tpu.core_type = #tpu.core_type<tc>, window_params = [{transform_indices = @transform_0, window_bounds = array<i64: 8, 16>}, {pipeline_mode = #tpu.pipeline_mode<synchronous>, transform_indices = @transform_1, window_bounds = array<i64: 64, 16>}, {pipeline_mode = #tpu.pipeline_mode<synchronous>, transform_indices = @transform_2, window_bounds = array<i64: 64, 1>}, {pipeline_mode = #tpu.pipeline_mode<synchronous>, transform_indices = @transform_3, window_bounds = array<i64: 32, 64>}, {pipeline_mode = #tpu.pipeline_mode<synchronous>, transform_indices = @transform_4, window_bounds = array<i64: 32, 1>}, {pipeline_mode = #tpu.pipeline_mode<synchronous>, transform_indices = @transform_5, window_bounds = array<i64: 1, 32>}, {pipeline_mode = #tpu.pipeline_mode<synchronous>, transform_indices = @transform_6, window_bounds = array<i64: 1, 1>}, {transform_indices = @transform_7, window_bounds = array<i64: 1, 8>}]} {
    %c0 = arith.constant 0 : index
    %c0_0 = arith.constant 0 : index
    %0 = vector.load %arg1[%c0, %c0_0] : memref<8x16xf32, #tpu.memory_space<vmem>>, vector<8x16xf32>
    %c0_1 = arith.constant 0 : index
    %c0_2 = arith.constant 0 : index
    %1 = vector.load %arg2[%c0_1, %c0_2] : memref<64x16xf32, #tpu.memory_space<vmem>>, vector<64x16xf32>
    %cst = arith.constant dense<0.000000e+00> : vector<64x8xf32>
    %2 = tpu.matmul %1, %0, %cst {dimension_numbers = #tpu.dot_dimension_numbers<[1], [1], [0], [0], [0, 0, 1, 0], [], []>} : vector<64x16xf32>, vector<8x16xf32>, vector<64x8xf32> -> vector<64x8xf32>
    %c0_3 = arith.constant 0 : index
    %c0_4 = arith.constant 0 : index
    %3 = vector.load %arg3[%c0_3, %c0_4] : memref<64x1xf32, #tpu.memory_space<vmem>>, vector<64x1xf32>
    %4 = vector.broadcast %3 : vector<64x1xf32> to vector<64x8xf32>
    %5 = arith.addf %2, %4 : vector<64x8xf32>
    %cst_5 = arith.constant 0.000000e+00 : f32
    %6 = vector.broadcast %cst_5 : f32 to vector<64x8xf32>
    %7 = arith.maximumf %5, %6 : vector<64x8xf32>
    %c0_6 = arith.constant 0 : index
    %c0_7 = arith.constant 0 : index
    %8 = vector.load %arg4[%c0_6, %c0_7] : memref<32x64xf32, #tpu.memory_space<vmem>>, vector<32x64xf32>
    %cst_8 = arith.constant dense<0.000000e+00> : vector<32x8xf32>
    %9 = tpu.matmul %8, %7, %cst_8 {dimension_numbers = #tpu.dot_dimension_numbers<[1], [0], [0], [1], [0, 0, 1, 1], [], []>} : vector<32x64xf32>, vector<64x8xf32>, vector<32x8xf32> -> vector<32x8xf32>
    %c0_9 = arith.constant 0 : index
    %c0_10 = arith.constant 0 : index
    %10 = vector.load %arg5[%c0_9, %c0_10] : memref<32x1xf32, #tpu.memory_space<vmem>>, vector<32x1xf32>
    %11 = vector.broadcast %10 : vector<32x1xf32> to vector<32x8xf32>
    %12 = arith.addf %9, %11 : vector<32x8xf32>
    %cst_11 = arith.constant 0.000000e+00 : f32
    %13 = vector.broadcast %cst_11 : f32 to vector<32x8xf32>
    %14 = arith.maximumf %12, %13 : vector<32x8xf32>
    %c0_12 = arith.constant 0 : index
    %c0_13 = arith.constant 0 : index
    %15 = vector.load %arg6[%c0_12, %c0_13] : memref<1x32xf32, #tpu.memory_space<vmem>>, vector<1x32xf32>
    %cst_14 = arith.constant dense<0.000000e+00> : vector<1x8xf32>
    %16 = tpu.matmul %15, %14, %cst_14 {dimension_numbers = #tpu.dot_dimension_numbers<[1], [0], [0], [1], [0, 0, 1, 1], [], []>} : vector<1x32xf32>, vector<32x8xf32>, vector<1x8xf32> -> vector<1x8xf32>
    %c0_15 = arith.constant 0 : index
    %c0_16 = arith.constant 0 : index
    %17 = vector.load %arg7[%c0_15, %c0_16] : memref<1x1xf32, #tpu.memory_space<vmem>>, vector<1x1xf32>
    %18 = vector.broadcast %17 : vector<1x1xf32> to vector<1x8xf32>
    %19 = arith.addf %16, %18 : vector<1x8xf32>
    %20 = arith.negf %19 : vector<1x8xf32>
    %21 = math.exp %20 : vector<1x8xf32>
    %cst_17 = arith.constant 1.000000e+00 : f32
    %22 = vector.broadcast %cst_17 : f32 to vector<1x8xf32>
    %23 = arith.addf %22, %21 : vector<1x8xf32>
    %24 = arith.divf %22, %23 : vector<1x8xf32>
    %c0_18 = arith.constant 0 : index
    %c0_19 = arith.constant 0 : index
    %25 = vector.load %arg8[%c0_18, %c0_19] : memref<1x8xf32, #tpu.memory_space<vmem>>, vector<1x8xf32>
    tpu.vector_store %arg8[%c0_18, %c0_19], %24 {strides = array<i32>} : memref<1x8xf32, #tpu.memory_space<vmem>>, vector<1x8xf32>,
    return
  }
  func.func @transform_0(%arg0: i32) -> (i32, i32) {
    %c0_i32 = arith.constant 0 : i32
    %c0_i32_0 = arith.constant 0 : i32
    return %arg0, %c0_i32 : i32, i32
  }
  func.func @transform_1(%arg0: i32) -> (i32, i32) {
    %c0_i32 = arith.constant 0 : i32
    %c0_i32_0 = arith.constant 0 : i32
    %c0_i32_1 = arith.constant 0 : i32
    return %c0_i32, %c0_i32_0 : i32, i32
  }
  func.func @transform_2(%arg0: i32) -> (i32, i32) {
    %c0_i32 = arith.constant 0 : i32
    %c0_i32_0 = arith.constant 0 : i32
    %c0_i32_1 = arith.constant 0 : i32
    return %c0_i32, %c0_i32_0 : i32, i32
  }
  func.func @transform_3(%arg0: i32) -> (i32, i32) {
    %c0_i32 = arith.constant 0 : i32
    %c0_i32_0 = arith.constant 0 : i32
    %c0_i32_1 = arith.constant 0 : i32
    return %c0_i32, %c0_i32_0 : i32, i32
  }
  func.func @transform_4(%arg0: i32) -> (i32, i32) {
    %c0_i32 = arith.constant 0 : i32
    %c0_i32_0 = arith.constant 0 : i32
    %c0_i32_1 = arith.constant 0 : i32
    return %c0_i32, %c0_i32_0 : i32, i32
  }
  func.func @transform_5(%arg0: i32) -> (i32, i32) {
    %c0_i32 = arith.constant 0 : i32
    %c0_i32_0 = arith.constant 0 : i32
    %c0_i32_1 = arith.constant 0 : i32
    return %c0_i32, %c0_i32_0 : i32, i32
  }
  func.func @transform_6(%arg0: i32) -> (i32, i32) {
    %c0_i32 = arith.constant 0 : i32
    %c0_i32_0 = arith.constant 0 : i32
    %c0_i32_1 = arith.constant 0 : i32
    return %c0_i32, %c0_i32_0 : i32, i32
  }
  func.func @transform_7(%arg0: i32) -> (i32, i32) {
    %c0_i32 = arith.constant 0 : i32
    %c0_i32_0 = arith.constant 0 : i32
    return %c0_i32, %arg0 : i32, i32
  }
}

</mosaic_0001>

<llo_original>
// kernel: phishing_nn_forward.1
$region0: #{phishing_nn_forward.1}
  #allocation0 [shape = 'u32[]', space=smem, size = 0x4, offset = 0x4, fixed_abs, tag = 'smem constant byte address 0x4 - core index']
  #allocation1 [shape = 'u32[144,128]{1,0:T(1,128)}', space=vmem, size = 0x12000, scoped, tag = 'internal scratch']
  #allocation2 [shape = 'f32[1,1]{1,0:T(1,128)S(1)}', space=vmem, size = 0x200, scoped, tag = 'scoped memory for phishing_nn_forward.1']
  %s0 = inlined_call_operand.vmem [shape: f32[8,16], index: 0, kind: input, shape index: {}]
  %s1 = inlined_call_operand.vmem [shape: f32[64,16], index: 1, kind: input, shape index: {}]
  %s2 = inlined_call_operand.vmem [shape: f32[64,1], index: 2, kind: input, shape index: {}]
  %s3 = inlined_call_operand.vmem [shape: f32[32,64], index: 3, kind: input, shape index: {}]
  %s4 = inlined_call_operand.vmem [shape: f32[32,1], index: 4, kind: input, shape index: {}]
  %s5 = inlined_call_operand.vmem [shape: f32[1,32], index: 5, kind: input, shape index: {}]
  %s6 = inlined_call_operand.<no memory space> [shape: f32[1,1], index: 6, kind: input, shape index: {}]
  %s7 = inlined_call_operand.hbm [shape: f32[1,8], index: 7, kind: output, shape index: {}]
  %s8 = sld [smem:[#allocation0]]
  $region38: #{phishing_nn_forward.1} parent=0
    _
  %s10 = ssub.s32 1, %s8
  %s11 = scalar_select 0, %s10, %s8
  %v12 = vstv %s6
  %13 = vst [vmem:[#allocation2] sm:$0x1] %v12
  $region1: #{phishing_nn_forward.1} parent=0
    #allocation3 [shape = 'u8[512]{0}', space=vmem, size = 0x400, scoped, tag = 'output window, operand 0, single buffered']
    #allocation4 [shape = 's32[1]{0}', space=sflag, size = 0x4, scoped, tag = 'scoped memory for phishing_nn_forward.1']
    %14 = vsyncpa [#allocation4], 0
    // Predicated region
    $region2: #{phishing_nn_forward.1} parent=1 // pred_check
      _
    $region3: #{phishing_nn_forward.1} parent=1 // pred_check_branch
      %16 = sbr.rel (0) target = $region5
    $region4: #{phishing_nn_forward.1} parent=1 // pred_region
      _
    $region5: #{phishing_nn_forward.1} parent=1 // pred_fallthru
      _
    // Predicated region
    $region6: #{phishing_nn_forward.1} parent=1 // pred_check
      _
    $region7: #{phishing_nn_forward.1} parent=1 // pred_check_branch
      %18 = sbr.rel (0) target = $region9
    $region8: #{phishing_nn_forward.1} parent=1 // pred_region
      _
    $region9: #{phishing_nn_forward.1} parent=1 // pred_fallthru
      _
    // Predicated region
    $region10: #{phishing_nn_forward.1} parent=1 // pred_check
      _
    $region11: #{phishing_nn_forward.1} parent=1 // pred_check_branch
      %20 = sbr.rel (0) target = $region13
    $region12: #{phishing_nn_forward.1} parent=1 // pred_region
      _
    $region13: #{phishing_nn_forward.1} parent=1 // pred_fallthru
      _
    // Predicated region
    $region14: #{phishing_nn_forward.1} parent=1 // pred_check
      _
    $region15: #{phishing_nn_forward.1} parent=1 // pred_check_branch
      %22 = sbr.rel (0) target = $region17
    $region16: #{phishing_nn_forward.1} parent=1 // pred_region
      _
    $region17: #{phishing_nn_forward.1} parent=1 // pred_fallthru
      _
    // Predicated region
    $region18: #{phishing_nn_forward.1} parent=1 // pred_check
      _
    $region19: #{phishing_nn_forward.1} parent=1 // pred_check_branch
      %24 = sbr.rel (0) target = $region21
    $region20: #{phishing_nn_forward.1} parent=1 // pred_region
      _
    $region21: #{phishing_nn_forward.1} parent=1 // pred_fallthru
      _
    // Predicated region
    $region22: #{phishing_nn_forward.1} parent=1 // pred_check
      _
    $region23: #{phishing_nn_forward.1} parent=1 // pred_check_branch
      %26 = sbr.rel (0) target = $region25
    $region24: #{phishing_nn_forward.1} parent=1 // pred_region
      _
    $region25: #{phishing_nn_forward.1} parent=1 // pred_fallthru
      _
    // Predicated region
    $region26: #{phishing_nn_forward.1} parent=1 // pred_check
      _
    $region27: #{phishing_nn_forward.1} parent=1 // pred_check_branch
      %28 = sbr.rel (0) target = $region29
    $region28: #{phishing_nn_forward.1} parent=1 // pred_region
      _
    $region29: #{phishing_nn_forward.1} parent=1 // pred_fallthru
      _
    %v29 = vld [vmem:[%s0] sm:$0xff]
    %v30 = vld [vmem:[%s1] sm:$0xff]
    %v31 = vld [vmem:[%s1 + $0x8] sm:$0xff]
    %v32 = vld [vmem:[%s1 + $0x10] sm:$0xff]
    %v33 = vld [vmem:[%s1 + $0x18] sm:$0xff]
    %v34 = vld [vmem:[%s1 + $0x20] sm:$0xff]
    %v35 = vld [vmem:[%s1 + $0x28] sm:$0xff]
    %v36 = vld [vmem:[%s1 + $0x30] sm:$0xff]
    %v37 = vld [vmem:[%s1 + $0x38] sm:$0xff]
    %v38 = vld [vmem:[%s2] sm:$0xff]
    %v39 = vld [vmem:[%s2 + $0x8] sm:$0xff]
    %v40 = vld [vmem:[%s2 + $0x10] sm:$0xff]
    %v41 = vld [vmem:[%s2 + $0x18] sm:$0xff]
    %v42 = vld [vmem:[%s2 + $0x20] sm:$0xff]
    %v43 = vld [vmem:[%s2 + $0x28] sm:$0xff]
    %v44 = vld [vmem:[%s2 + $0x30] sm:$0xff]
    %v45 = vld [vmem:[%s2 + $0x38] sm:$0xff]
    %47 = vset.pattern.permute.xlu0 0
    %48 = vperm.xlu0 %47, %v38
    %v49 = vpop.permute.xlu0 %48
    %52 = vset.pattern.permute.xlu0 0
    %53 = vperm.xlu0 %52, %v39
    %v54 = vpop.permute.xlu0 %53
    %57 = vset.pattern.permute.xlu0 0
    %58 = vperm.xlu0 %57, %v40
    %v59 = vpop.permute.xlu0 %58
    %62 = vset.pattern.permute.xlu0 0
    %63 = vperm.xlu0 %62, %v41
    %v64 = vpop.permute.xlu0 %63
    %67 = vset.pattern.permute.xlu0 0
    %68 = vperm.xlu0 %67, %v42
    %v69 = vpop.permute.xlu0 %68
    %72 = vset.pattern.permute.xlu0 0
    %73 = vperm.xlu0 %72, %v43
    %v74 = vpop.permute.xlu0 %73
    %77 = vset.pattern.permute.xlu0 0
    %78 = vperm.xlu0 %77, %v44
    %v79 = vpop.permute.xlu0 %78
    %82 = vset.pattern.permute.xlu0 0
    %83 = vperm.xlu0 %82, %v45
    %v84 = vpop.permute.xlu0 %83
    %vm86 = vcmask 130048
    %v88 = vsel %vm86, %v30, 0
    %v91 = vsel %vm86, %v31, 0
    %v94 = vsel %vm86, %v32, 0
    %v97 = vsel %vm86, %v33, 0
    %v100 = vsel %vm86, %v34, 0
    %v103 = vsel %vm86, %v35, 0
    %v106 = vsel %vm86, %v36, 0
    %v109 = vsel %vm86, %v37, 0
    %v112 = vsel %vm86, %v29, 0
    %114 = vmatprep.subr.mxu0 0.0
    %115 = vmatpush1.xpose.msra.mxu0 %v112
    %116 = vmatprep.subr.mxu0 0.0
    %117 = vmatpush1.xpose.msra.mxu0 0.0
    %118 = vmatprep.subr.mxu0 0.0
    %119 = vmatpush1.xpose.msra.mxu0 0.0
    %120 = vmatprep.subr.mxu0 0.0
    %121 = vmatpush1.xpose.msra.mxu0 0.0
    %122 = vmatprep.subr.mxu0 0.0
    %123 = vmatpush1.xpose.msra.mxu0 0.0
    %124 = vmatprep.subr.mxu0 0.0
    %125 = vmatpush1.xpose.msra.mxu0 0.0
    %126 = vmatprep.subr.mxu0 0.0
    %127 = vmatpush1.xpose.msra.mxu0 0.0
    %128 = vmatprep.subr.mxu0 0.0
    %129 = vmatpush1.xpose.msra.mxu0 0.0
    %130 = vmatprep.subr.mxu0 0.0
    %131 = vmatpush1.xpose.msra.mxu0 0.0
    %132 = vmatprep.subr.mxu0 0.0
    %133 = vmatpush1.xpose.msra.mxu0 0.0
    %134 = vmatprep.subr.mxu0 0.0
    %135 = vmatpush1.xpose.msra.mxu0 0.0
    %136 = vmatprep.subr.mxu0 0.0
    %137 = vmatpush1.xpose.msra.mxu0 0.0
    %138 = vmatprep.subr.mxu0 0.0
    %139 = vmatpush1.xpose.msra.mxu0 0.0
    %140 = vmatprep.subr.mxu0 0.0
    %141 = vmatpush1.xpose.msra.mxu0 0.0
    %142 = vmatprep.subr.mxu0 0.0
    %143 = vmatpush1.xpose.msra.mxu0 0.0
    %144 = vmatprep.subr.mxu0 0.0
    %145 = vmatpush1.xpose.msra.mxu0 0.0
    %146 = vmatprep.subr.mxu0 0.0
    %147 = vmatpush1.xpose.msra.mxu0 0.0
    %148 = vmatprep.subr.mxu0 0.0
    %149 = vmatpush1.xpose.msra.mxu0 0.0
    %150 = vmatprep.subr.mxu0 0.0
    %151 = vmatpush1.xpose.msra.mxu0 0.0
    %152 = vmatprep.subr.mxu0 0.0
    %153 = vmatpush1.xpose.msra.mxu0 0.0
    %154 = vmatprep.subr.mxu0 0.0
    %155 = vmatpush1.xpose.msra.mxu0 0.0
    %156 = vmatprep.subr.mxu0 0.0
    %157 = vmatpush1.xpose.msra.mxu0 0.0
    %158 = vmatprep.subr.mxu0 0.0
    %159 = vmatpush1.xpose.msra.mxu0 0.0
    %160 = vmatprep.subr.mxu0 0.0
    %161 = vmatpush1.xpose.msra.mxu0 0.0
    %162 = vmatprep.subr.mxu0 0.0
    %163 = vmatpush1.xpose.msra.mxu0 0.0
    %164 = vmatprep.subr.mxu0 0.0
    %165 = vmatpush1.xpose.msra.mxu0 0.0
    %166 = vmatprep.subr.mxu0 0.0
    %167 = vmatpush1.xpose.msra.mxu0 0.0
    %168 = vmatprep.subr.mxu0 0.0
    %169 = vmatpush1.xpose.msra.mxu0 0.0
    %170 = vmatprep.subr.mxu0 0.0
    %171 = vmatpush1.xpose.msra.mxu0 0.0
    %172 = vmatprep.subr.mxu0 0.0
    %173 = vmatpush1.xpose.msra.mxu0 0.0
    %174 = vmatprep.subr.mxu0 0.0
    %175 = vmatpush1.xpose.msra.mxu0 0.0
    %176 = vmatprep.subr.mxu0 0.0
    %177 = vmatpush1.xpose.msra.mxu0 0.0
    %178 = vmatprep.mubr.f32.mxu0 0.0
    %179 = vmatmul.mubr.f32.gmra.mrb[0].mxu0 %v88
    %v180 = vpop.f32.mrb[0].mxu0
    %v181 = vadd.f32 %v49, %v180
    %v182 = vpop.f32.mrb[0].mxu0
    %183 = vmatprep.mubr.f32.mxu0 0.0
    %184 = vmatmul.mubr.f32.gmra.mrb[0].mxu0 %v91
    %v185 = vpop.f32.mrb[0].mxu0
    %v186 = vadd.f32 %v54, %v185
    %v187 = vpop.f32.mrb[0].mxu0
    %188 = vmatprep.mubr.f32.mxu0 0.0
    %189 = vmatmul.mubr.f32.gmra.mrb[0].mxu0 %v94
    %v190 = vpop.f32.mrb[0].mxu0
    %v191 = vadd.f32 %v59, %v190
    %v192 = vpop.f32.mrb[0].mxu0
    %193 = vmatprep.mubr.f32.mxu0 0.0
    %194 = vmatmul.mubr.f32.gmra.mrb[0].mxu0 %v97
    %v195 = vpop.f32.mrb[0].mxu0
    %v196 = vadd.f32 %v64, %v195
    %v197 = vpop.f32.mrb[0].mxu0
    %198 = vmatprep.mubr.f32.mxu0 0.0
    %199 = vmatmul.mubr.f32.gmra.mrb[0].mxu0 %v100
    %v200 = vpop.f32.mrb[0].mxu0
    %v201 = vadd.f32 %v69, %v200
    %v202 = vpop.f32.mrb[0].mxu0
    %203 = vmatprep.mubr.f32.mxu0 0.0
    %204 = vmatmul.mubr.f32.gmra.mrb[0].mxu0 %v103
    %v205 = vpop.f32.mrb[0].mxu0
    %v206 = vadd.f32 %v74, %v205
    %v207 = vpop.f32.mrb[0].mxu0
    %208 = vmatprep.mubr.f32.mxu0 0.0
    %209 = vmatmul.mubr.f32.gmra.mrb[0].mxu0 %v106
    %v210 = vpop.f32.mrb[0].mxu0
    %v211 = vadd.f32 %v79, %v210
    %v212 = vpop.f32.mrb[0].mxu0
    %213 = vmatprep.mubr.f32.mxu0 0.0
    %214 = vmatmul.mubr.f32.gmra.mrb[0].mxu0 %v109
    %v215 = vpop.f32.mrb[0].mxu0
    %v216 = vadd.f32 %v84, %v215
    %v217 = vpop.f32.mrb[0].mxu0
    %218 = vdwg.mxu0
    %v219 = vmax.f32 %v181, 0.0
    %v220 = vmax.f32 %v186, 0.0
    %v221 = vmax.f32 %v191, 0.0
    %v222 = vmax.f32 %v196, 0.0
    %v223 = vmax.f32 %v201, 0.0
    %v224 = vmax.f32 %v206, 0.0
    %v225 = vmax.f32 %v211, 0.0
    %v226 = vmax.f32 %v216, 0.0
    %v227 = vld [vmem:[%s3] sm:$0xff]
    %v228 = vld [vmem:[%s3 + $0x8] sm:$0xff]
    %v229 = vld [vmem:[%s3 + $0x10] sm:$0xff]
    %v230 = vld [vmem:[%s3 + $0x18] sm:$0xff]
    %v231 = vld [vmem:[%s4] sm:$0xff]
    %v232 = vld [vmem:[%s4 + $0x8] sm:$0xff]
    %v233 = vld [vmem:[%s4 + $0x10] sm:$0xff]
    %v234 = vld [vmem:[%s4 + $0x18] sm:$0xff]
    %236 = vset.pattern.permute.xlu0 0
    %237 = vperm.xlu0 %236, %v231
    %v238 = vpop.permute.xlu0 %237
    %241 = vset.pattern.permute.xlu0 0
    %242 = vperm.xlu0 %241, %v232
    %v243 = vpop.permute.xlu0 %242
    %246 = vset.pattern.permute.xlu0 0
    %247 = vperm.xlu0 %246, %v233
    %v248 = vpop.permute.xlu0 %247
    %251 = vset.pattern.permute.xlu0 0
    %252 = vperm.xlu0 %251, %v234
    %v253 = vpop.permute.xlu0 %252
    %vm255 = vcmask 523264
    %v257 = vsel %vm255, %v227, 0
    %v260 = vsel %vm255, %v228, 0
    %v263 = vsel %vm255, %v229, 0
    %v266 = vsel %vm255, %v230, 0
    %268 = vmatprep.subr.mxu0 0.0
    %269 = vmatpush1.msra.mxu0 %v219
    %270 = vmatprep.subr.mxu0 0.0
    %271 = vmatpush1.msra.mxu0 %v220
    %272 = vmatprep.subr.mxu0 0.0
    %273 = vmatpush1.msra.mxu0 %v221
    %274 = vmatprep.subr.mxu0 0.0
    %275 = vmatpush1.msra.mxu0 %v222
    %276 = vmatprep.subr.mxu0 0.0
    %277 = vmatpush1.msra.mxu0 %v223
    %278 = vmatprep.subr.mxu0 0.0
    %279 = vmatpush1.msra.mxu0 %v224
    %280 = vmatprep.subr.mxu0 0.0
    %281 = vmatpush1.msra.mxu0 %v225
    %282 = vmatprep.subr.mxu0 0.0
    %283 = vmatpush1.msra.mxu0 %v226
    %284 = vmatprep.subr.mxu0 0.0
    %285 = vmatpush1.msra.mxu0 0.0
    %286 = vmatprep.subr.mxu0 0.0
    %287 = vmatpush1.msra.mxu0 0.0
    %288 = vmatprep.subr.mxu0 0.0
    %289 = vmatpush1.msra.mxu0 0.0
    %290 = vmatprep.subr.mxu0 0.0
    %291 = vmatpush1.msra.mxu0 0.0
    %292 = vmatprep.subr.mxu0 0.0
    %293 = vmatpush1.msra.mxu0 0.0
    %294 = vmatprep.subr.mxu0 0.0
    %295 = vmatpush1.msra.mxu0 0.0
    %296 = vmatprep.subr.mxu0 0.0
    %297 = vmatpush1.msra.mxu0 0.0
    %298 = vmatprep.subr.mxu0 0.0
    %299 = vmatpush1.msra.mxu0 0.0
    %300 = vmatprep.subr.mxu0 0.0
    %301 = vmatpush1.msra.mxu0 0.0
    %302 = vmatprep.subr.mxu0 0.0
    %303 = vmatpush1.msra.mxu0 0.0
    %304 = vmatprep.subr.mxu0 0.0
    %305 = vmatpush1.msra.mxu0 0.0
    %306 = vmatprep.subr.mxu0 0.0
    %307 = vmatpush1.msra.mxu0 0.0
    %308 = vmatprep.subr.mxu0 0.0
    %309 = vmatpush1.msra.mxu0 0.0
    %310 = vmatprep.subr.mxu0 0.0
    %311 = vmatpush1.msra.mxu0 0.0
    %312 = vmatprep.subr.mxu0 0.0
    %313 = vmatpush1.msra.mxu0 0.0
    %314 = vmatprep.subr.mxu0 0.0
    %315 = vmatpush1.msra.mxu0 0.0
    %316 = vmatprep.subr.mxu0 0.0
    %317 = vmatpush1.msra.mxu0 0.0
    %318 = vmatprep.subr.mxu0 0.0
    %319 = vmatpush1.msra.mxu0 0.0
    %320 = vmatprep.subr.mxu0 0.0
    %321 = vmatpush1.msra.mxu0 0.0
    %322 = vmatprep.subr.mxu0 0.0
    %323 = vmatpush1.msra.mxu0 0.0
    %324 = vmatprep.subr.mxu0 0.0
    %325 = vmatpush1.msra.mxu0 0.0
    %326 = vmatprep.subr.mxu0 0.0
    %327 = vmatpush1.msra.mxu0 0.0
    %328 = vmatprep.subr.mxu0 0.0
    %329 = vmatpush1.msra.mxu0 0.0
    %330 = vmatprep.subr.mxu0 0.0
    %331 = vmatpush1.msra.mxu0 0.0
    %332 = vmatprep.mubr.f32.mxu0 0.0
    %333 = vmatmul.mubr.f32.gmra.mrb[0].mxu0 %v257
    %v334 = vpop.f32.mrb[0].mxu0
    %v335 = vadd.f32 %v238, %v334
    %v336 = vpop.f32.mrb[0].mxu0
    %337 = vmatprep.mubr.f32.mxu0 0.0
    %338 = vmatmul.mubr.f32.gmra.mrb[0].mxu0 %v260
    %v339 = vpop.f32.mrb[0].mxu0
    %v340 = vadd.f32 %v243, %v339
    %v341 = vpop.f32.mrb[0].mxu0
    %342 = vmatprep.mubr.f32.mxu0 0.0
    %343 = vmatmul.mubr.f32.gmra.mrb[0].mxu0 %v263
    %v344 = vpop.f32.mrb[0].mxu0
    %v345 = vadd.f32 %v248, %v344
    %v346 = vpop.f32.mrb[0].mxu0
    %347 = vmatprep.mubr.f32.mxu0 0.0
    %348 = vmatmul.mubr.f32.gmra.mrb[0].mxu0 %v266
    %v349 = vpop.f32.mrb[0].mxu0
    %v350 = vadd.f32 %v253, %v349
    %v351 = vpop.f32.mrb[0].mxu0
    %352 = vdwg.mxu0
    %v353 = vmax.f32 %v335, 0.0
    %v354 = vmax.f32 %v340, 0.0
    %v355 = vmax.f32 %v345, 0.0
    %v356 = vmax.f32 %v350, 0.0
    %v357 = vld [vmem:[%s5] sm:$0x1]
    %v358 = vld [vmem:[#allocation2] sm:$0x1]
    %360 = vset.pattern.permute.xlu0 0
    %361 = vperm.xlu0 %360, %v358
    %v362 = vpop.permute.xlu0 %361
    %v364 = vlaneseq
    %v365 = vshrl.u32 %v364, 7
    %v366 = vsub.s32 0, %v365
    %v367 = vrot.slane %v362, %v366
    %vm368 = vcmask 261120
    %v370 = vsel %vm368, %v357, 0
    %372 = vmatprep.subr.mxu0 0.0
    %373 = vmatpush1.msra.mxu0 %v353
    %374 = vmatprep.subr.mxu0 0.0
    %375 = vmatpush1.msra.mxu0 %v354
    %376 = vmatprep.subr.mxu0 0.0
    %377 = vmatpush1.msra.mxu0 %v355
    %378 = vmatprep.subr.mxu0 0.0
    %379 = vmatpush1.msra.mxu0 %v356
    %380 = vmatprep.subr.mxu0 0.0
    %381 = vmatpush1.msra.mxu0 0.0
    %382 = vmatprep.subr.mxu0 0.0
    %383 = vmatpush1.msra.mxu0 0.0
    %384 = vmatprep.subr.mxu0 0.0
    %385 = vmatpush1.msra.mxu0 0.0
    %386 = vmatprep.subr.mxu0 0.0
    %387 = vmatpush1.msra.mxu0 0.0
    %388 = vmatprep.subr.mxu0 0.0
    %389 = vmatpush1.msra.mxu0 0.0
    %390 = vmatprep.subr.mxu0 0.0
    %391 = vmatpush1.msra.mxu0 0.0
    %392 = vmatprep.subr.mxu0 0.0
    %393 = vmatpush1.msra.mxu0 0.0
    %394 = vmatprep.subr.mxu0 0.0
    %395 = vmatpush1.msra.mxu0 0.0
    %396 = vmatprep.subr.mxu0 0.0
    %397 = vmatpush1.msra.mxu0 0.0
    %398 = vmatprep.subr.mxu0 0.0
    %399 = vmatpush1.msra.mxu0 0.0
    %400 = vmatprep.subr.mxu0 0.0
    %401 = vmatpush1.msra.mxu0 0.0
    %402 = vmatprep.subr.mxu0 0.0
    %403 = vmatpush1.msra.mxu0 0.0
    %404 = vmatprep.subr.mxu0 0.0
    %405 = vmatpush1.msra.mxu0 0.0
    %406 = vmatprep.subr.mxu0 0.0
    %407 = vmatpush1.msra.mxu0 0.0
    %408 = vmatprep.subr.mxu0 0.0
    %409 = vmatpush1.msra.mxu0 0.0
    %410 = vmatprep.subr.mxu0 0.0
    %411 = vmatpush1.msra.mxu0 0.0
    %412 = vmatprep.subr.mxu0 0.0
    %413 = vmatpush1.msra.mxu0 0.0
    %414 = vmatprep.subr.mxu0 0.0
    %415 = vmatpush1.msra.mxu0 0.0
    %416 = vmatprep.subr.mxu0 0.0
    %417 = vmatpush1.msra.mxu0 0.0
    %418 = vmatprep.subr.mxu0 0.0
    %419 = vmatpush1.msra.mxu0 0.0
    %420 = vmatprep.subr.mxu0 0.0
    %421 = vmatpush1.msra.mxu0 0.0
    %422 = vmatprep.subr.mxu0 0.0
    %423 = vmatpush1.msra.mxu0 0.0
    %424 = vmatprep.subr.mxu0 0.0
    %425 = vmatpush1.msra.mxu0 0.0
    %426 = vmatprep.subr.mxu0 0.0
    %427 = vmatpush1.msra.mxu0 0.0
    %428 = vmatprep.subr.mxu0 0.0
    %429 = vmatpush1.msra.mxu0 0.0
    %430 = vmatprep.subr.mxu0 0.0
    %431 = vmatpush1.msra.mxu0 0.0
    %432 = vmatprep.subr.mxu0 0.0
    %433 = vmatpush1.msra.mxu0 0.0
    %434 = vmatprep.subr.mxu0 0.0
    %435 = vmatpush1.msra.mxu0 0.0
    %436 = vmatprep.mubr.f32.mxu0 0.0
    %437 = vmatmul.mubr.f32.gmra.mrb[0].mxu0 %v370
    %v438 = vpop.f32.mrb[0].mxu0
    %v439 = vadd.f32 %v367, %v438
    %v440 = vpop.f32.mrb[0].mxu0
    %441 = vdwg.mxu0
    %v442 = vxor.u32 %v439, 2147483648
    %v443 = vmul.f32 %v442, 1.442695
    %v444 = vpow.pop %v443
    %v445 = vadd.f32 %v444, 1.0
    %v446 = vrcp.pop %v445
    %v447 = vmul.f32 1.0, %v446
    %vm448 = vcmask 57344
    %449 = vst.msk [vmem:[#allocation3] sm:$0x1] %vm448, %v447
    // Predicated region
    $region30: #{phishing_nn_forward.1} parent=1 // pred_check
      _
    $region31: #{phishing_nn_forward.1} parent=1 // pred_check_branch
      %451 = sbr.rel (0) target = $region33
    $region32: #{phishing_nn_forward.1} parent=1 // pred_region
      %s453 = ssub.s32 16, 16
      %454 = vsyncadd [#allocation4], %s453
      %s456 = sshll.u32 [#allocation3], 4
      %s457 = int_to_ptr.vmem [resolvable:$true] %s456
      %459 = dma.vmem_to_hbm [thread:$0]  %s457, 16, %s7, [#allocation4]
    $region33: #{phishing_nn_forward.1} parent=1 // pred_fallthru
      _
    // Predicated region
    $region34: #{phishing_nn_forward.1} parent=1 // pred_check
      _
    $region35: #{phishing_nn_forward.1} parent=1 // pred_check_branch
      %461 = sbr.rel (0) target = $region37
    $region36: #{phishing_nn_forward.1} parent=1 // pred_region
      %462 = dma.done [#allocation4], 16
    $region37: #{phishing_nn_forward.1} parent=1 // pred_fallthru
      _
    %463 = vsyncpa [#allocation4], 1

</llo_original>
